<compile_context>
chip_gen: v7x
topology: tpu7x:2x2x1
jax: 0.10.0
libtpu: 0.0.40
codegen_flags: <defaults>
</compile_context>

<pallas_src>
import functools

import jax
import jax.numpy as jnp
from jax.experimental import pallas as pl
from jax.experimental.pallas import tpu as pltpu


def _round_up(x: int, m: int) -> int:
    return ((x + m - 1) // m) * m


@functools.lru_cache(maxsize=None)
def _tpu_generation():
    """Returns (tensorcores_per_chip, physical_vmem_bytes_per_tensorcore)."""
    kind = ""
    try:
        kind = jax.devices()[0].device_kind.lower()
    except Exception:
        pass
    is_v7 = ("v7" in kind) or ("7x" in kind)
    default_vmem = (64 if is_v7 else 128) * 1024 * 1024
    try:
        vmem_phys = int(pltpu.get_tpu_info().vmem_capacity_bytes)
    except Exception:
        vmem_phys = 0
    if vmem_phys <= 0:
        vmem_phys = default_vmem
    vmem_phys = min(vmem_phys, default_vmem)  # per-TensorCore budget
    return (2 if is_v7 else 1), vmem_phys


def mahalanobis_distance_loss(embeddings1, embeddings2, target, cov_inv,
                              *, tb_max=None):
    """embeddings1/2: (B, D) f32 or bf16; target: (B,); cov_inv: (D, D) -> scalar f32."""
    e1 = jnp.asarray(embeddings1)
    e2 = jnp.asarray(embeddings2)
    ok_dtypes = (jnp.dtype(jnp.bfloat16), jnp.dtype(jnp.float32))
    if (e1.dtype != e2.dtype) or (e1.dtype not in ok_dtypes):
        e1 = e1.astype(jnp.float32)
        e2 = e2.astype(jnp.float32)
    if e1.ndim == 1:  # mirrors the diff.unsqueeze(0) branch of the PyTorch module
        e1 = e1[None, :]
        e2 = e2[None, :]
    B, D = e1.shape
    tgt = jnp.asarray(target, jnp.float32).reshape(B, 1)
    # bf16 MXU operand; an f32 matmul would be emulated as multiple bf16 passes.
    cinv_bf16 = jnp.asarray(cov_inv, jnp.float32).astype(jnp.bfloat16)

    # --- generation-aware tiling / VMEM budget ------------------------------
    NC, vmem_phys = _tpu_generation()
    # Scoped-VMEM limit: ~75% of physical, capped at 100 MiB
    # (v5e/v6e: 96 MiB of their 128 MiB; v7x: 48 MiB of its 64 MiB).
    vmem_limit = min(vmem_phys * 3 // 4, 100 * 1024 * 1024)

    emb_bytes = e1.dtype.itemsize
    # Conservative VMEM model: double-buffered e1/e2 tiles + (worst-case
    # double-buffered) bf16 cov_inv + lane-padded (TB,128) target blocks + slack.
    cov_bytes = 2 * D * D * 2
    per_row = 2 * 2 * D * emb_bytes + 2 * 128 * 4
    slack = 2 * 1024 * 1024
    tb_budget = max(8, (vmem_limit - cov_bytes - slack) // per_row)

    rows_per_core = -(-B // NC)
    tb_cap = 1024 if tb_max is None else tb_max   # >=512-row tiles hit the HBM roofline
    TB = min(tb_cap, tb_budget, _round_up(rows_per_core, 8))
    TB = max(8, (TB // 8) * 8)                    # rows per grid step, multiple of 8
    NT = -(-rows_per_core // TB)                  # batch tiles per core
    B_pad = NC * NT * TB

    if B_pad != B:
        # Pad rows contribute exactly zero loss: e1 = e2 = 0 -> dist = 0, and
        # target = 1.0 -> 1*0 + 0*relu(1-0) = 0.  No in-kernel mask needed.
        e1 = jnp.pad(e1, ((0, B_pad - B), (0, 0)))
        e2 = jnp.pad(e2, ((0, B_pad - B), (0, 0)))
        tgt = jnp.pad(tgt, ((0, B_pad - B), (0, 0)), constant_values=1.0)

    def kernel(e1_ref, e2_ref, cinv_ref, tgt_ref, out_ref):
        t = pl.program_id(1)

        # Per-core partial-sum accumulator lives in the resident output block.
        @pl.when(t == 0)
        def _init():
            out_ref[...] = jnp.zeros_like(out_ref)

        # f32 subtraction (cancellation-safe) even if the streams are bf16.
        diff = e1_ref[...].astype(jnp.float32) - e2_ref[...].astype(jnp.float32)
        # bf16 operands on the MXU, f32 accumulation.
        m = jnp.dot(diff.astype(jnp.bfloat16), cinv_ref[...],
                    preferred_element_type=jnp.float32)            # (TB, D) f32
        # diag(diff @ cov_inv @ diff.T) == row-wise sum of (m * diff)
        d2 = jnp.sum(m * diff, axis=-1, keepdims=True)             # (TB, 1)
        d2 = jnp.maximum(d2, 0.0)          # guard: cov_inv only numerically SPD
        dist = jnp.sqrt(d2)                                        # (TB, 1)

        tgt_blk = tgt_ref[...]                                     # (TB, 1)
        per_ex = tgt_blk * dist + (1.0 - tgt_blk) * jnp.maximum(1.0 - dist, 0.0)

        # Broadcast-add the tile's loss SUM into the lane-dense (8,128) partial
        # block (unmasked store; mean division happens once in the wrapper).
        out_ref[...] += jnp.sum(per_ex)

    e_spec = pl.BlockSpec((TB, D), lambda c, t: (c * NT + t, 0))
    tgt_spec = pl.BlockSpec((TB, 1), lambda c, t: (c * NT + t, 0))
    out_spec = pl.BlockSpec((1, 8, 128), lambda c, t: (c, 0, 0))

    def run(cov_spec):
        return pl.pallas_call(
            kernel,
            out_shape=jax.ShapeDtypeStruct((NC, 8, 128), jnp.float32),
            grid_spec=pltpu.PrefetchScalarGridSpec(
                num_scalar_prefetch=0,
                grid=(NC, NT),
                in_specs=[e_spec, e_spec, cov_spec, tgt_spec],
                out_specs=out_spec,
            ),
            compiler_params=pltpu.CompilerParams(
                dimension_semantics=("parallel", "arbitrary"),
                vmem_limit_bytes=int(vmem_limit),
            ),
        )(e1, e2, cinv_bf16, tgt)

    try:
        # cov_inv never changes (constant index_map) -> single-buffer it so the
        # default second buffer does not eat into the batch-tile VMEM budget.
        cov_spec = pl.BlockSpec((D, D), lambda c, t: (0, 0),
                                pipeline_mode=pl.Buffered(1))
        out = run(cov_spec)
    except Exception:
        # Older/stricter lowerings may reject buffer_count=1; the default
        # resident double-buffered block is still correct (just more VMEM).
        out = run(pl.BlockSpec((D, D), lambda c, t: (0, 0)))

    # Combine the per-core partial sums and take the mean over the true batch.
    return jnp.sum(out[:, 0, 0]) / B


def _reference_loss(e1, e2, target, cov_inv):
    diff = jnp.asarray(e1, jnp.float32) - jnp.asarray(e2, jnp.float32)
    dist = jnp.sqrt(jnp.diag(diff @ cov_inv @ diff.T))
    return jnp.mean(target * dist + (1.0 - target) * jnp.maximum(1.0 - dist, 0.0))


if __name__ == "__main__":
    key = jax.random.PRNGKey(0)
    D = 32
    k1, k2, k3, k4, j1, j2, j3 = jax.random.split(key, 7)

    # Deterministic synthetic SPD "covariance matrix" (stands in for
    # np.cov(X_encodings, rowvar=False)); inverse done in plain JAX like
    # torch.linalg.inv in the module's __init__.
    A = jax.random.normal(k4, (D, D), dtype=jnp.float32)
    covariance_matrix = A @ A.T / D + 0.5 * jnp.eye(D, dtype=jnp.float32)
    cov_inv = jnp.linalg.inv(covariance_matrix)

    # --- test 1: small batch, single tile ------------------------------------
    B = 8
    e1 = jax.random.normal(k1, (B, D), dtype=jnp.float32)
    e2 = jax.random.normal(k2, (B, D), dtype=jnp.float32)
    target = (jax.random.uniform(k3, (B,)) > 0.5).astype(jnp.float32)

    loss = mahalanobis_distance_loss(e1, e2, target, cov_inv)
    loss = jax.block_until_ready(loss)
    ref = _reference_loss(e1, e2, target, cov_inv)
    # bf16 MXU operands (f32 accumulation) -> loose tolerance vs. full-f32 ref.
    assert jnp.allclose(loss, ref, rtol=5e-2, atol=5e-2), (loss, ref)

    # --- test 2: multi-tile batch (exercises accumulation + row padding) -----
    B2 = 37
    f1 = jax.random.normal(j1, (B2, D), dtype=jnp.float32)
    f2 = jax.random.normal(j2, (B2, D), dtype=jnp.float32)
    t2 = (jax.random.uniform(j3, (B2,)) > 0.5).astype(jnp.float32)

    loss2 = mahalanobis_distance_loss(f1, f2, t2, cov_inv, tb_max=8)
    loss2 = jax.block_until_ready(loss2)
    ref2 = _reference_loss(f1, f2, t2, cov_inv)
    assert jnp.allclose(loss2, ref2, rtol=5e-2, atol=5e-2), (loss2, ref2)

    print("KERNEL_OK")
</pallas_src>

<mosaic_0001>
module attributes {stable_mosaic.version = 11 : i64} {
  func.func @kernel(%arg0: i32, %arg1: i32, %arg2: memref<8x32xf32, #tpu.memory_space<vmem>>, %arg3: memref<8x32xf32, #tpu.memory_space<vmem>>, %arg4: memref<32x32xbf16, #tpu.memory_space<vmem>>, %arg5: memref<8x1xf32, #tpu.memory_space<vmem>>, %arg6: memref<1x8x128xf32, #tpu.memory_space<vmem>>) attributes {dimension_semantics = [#tpu.dimension_semantics<parallel>, #tpu.dimension_semantics<arbitrary>], iteration_bounds = array<i64: 1, 1>, scalar_prefetch = 0 : i64, scratch_operands = 0 : i64, tpu.core_type = #tpu.core_type<tc>, window_params = [{transform_indices = @transform_0, window_bounds = array<i64: 8, 32>}, {transform_indices = @transform_1, window_bounds = array<i64: 8, 32>}, {pipeline_mode = #tpu.pipeline_mode<synchronous>, transform_indices = @transform_2, window_bounds = array<i64: 32, 32>}, {transform_indices = @transform_3, window_bounds = array<i64: 8, 1>}, {transform_indices = @transform_4, window_bounds = array<i64: 1, 8, 128>}]} {
    %c0_i32 = arith.constant 0 : i32
    %0 = arith.cmpi eq, %arg1, %c0_i32 : i32
    %1 = arith.extui %0 : i1 to i32
    %c0_i32_0 = arith.constant 0 : i32
    %2 = arith.cmpi ne, %1, %c0_i32_0 : i32
    scf.if %2 {
      %cst_20 = arith.constant 0.000000e+00 : f32
      %33 = vector.broadcast %cst_20 : f32 to vector<1x8x128xf32>
      %c0_21 = arith.constant 0 : index
      %c0_22 = arith.constant 0 : index
      %c0_23 = arith.constant 0 : index
      %34 = vector.load %arg6[%c0_21, %c0_22, %c0_23] : memref<1x8x128xf32, #tpu.memory_space<vmem>>, vector<1x8x128xf32>
      tpu.vector_store %arg6[%c0_21, %c0_22, %c0_23], %33 {strides = array<i32>} : memref<1x8x128xf32, #tpu.memory_space<vmem>>, vector<1x8x128xf32>,
    } else {
    }
    %c0 = arith.constant 0 : index
    %c0_1 = arith.constant 0 : index
    %3 = vector.load %arg2[%c0, %c0_1] : memref<8x32xf32, #tpu.memory_space<vmem>>, vector<8x32xf32>
    %c0_2 = arith.constant 0 : index
    %c0_3 = arith.constant 0 : index
    %4 = vector.load %arg3[%c0_2, %c0_3] : memref<8x32xf32, #tpu.memory_space<vmem>>, vector<8x32xf32>
    %5 = arith.subf %3, %4 : vector<8x32xf32>
    %6 = arith.truncf %5 : vector<8x32xf32> to vector<8x32xbf16>
    %c0_4 = arith.constant 0 : index
    %c0_5 = arith.constant 0 : index
    %7 = vector.load %arg4[%c0_4, %c0_5] : memref<32x32xbf16, #tpu.memory_space<vmem>>, vector<32x32xbf16>
    %cst = arith.constant dense<0.000000e+00> : vector<8x32xf32>
    %8 = tpu.matmul %6, %7, %cst {dimension_numbers = #tpu.dot_dimension_numbers<[1], [0], [0], [1], [0, 0, 1, 1], [], []>} : vector<8x32xbf16>, vector<32x32xbf16>, vector<8x32xf32> -> vector<8x32xf32>
    %9 = arith.mulf %8, %5 : vector<8x32xf32>
    %cst_6 = arith.constant dense<0.000000e+00> : vector<8xf32>
    %10 = vector.multi_reduction <add>, %9, %cst_6 [1] : vector<8x32xf32> to vector<8xf32>
    %11 = vector.shape_cast %10 : vector<8xf32> to vector<8x1xf32>
    %cst_7 = arith.constant 0.000000e+00 : f32
    %12 = vector.broadcast %cst_7 : f32 to vector<8x1xf32>
    %13 = arith.maximumf %11, %12 : vector<8x1xf32>
    %14 = math.sqrt %13 : vector<8x1xf32>
    %c0_8 = arith.constant 0 : index
    %c0_9 = arith.constant 0 : index
    %15 = vector.load %arg5[%c0_8, %c0_9] : memref<8x1xf32, #tpu.memory_space<vmem>>, vector<8x1xf32>
    %16 = arith.mulf %15, %14 : vector<8x1xf32>
    %cst_10 = arith.constant 1.000000e+00 : f32
    %17 = vector.broadcast %cst_10 : f32 to vector<8x1xf32>
    %18 = arith.subf %17, %15 : vector<8x1xf32>
    %cst_11 = arith.constant 1.000000e+00 : f32
    %19 = vector.broadcast %cst_11 : f32 to vector<8x1xf32>
    %20 = arith.subf %19, %14 : vector<8x1xf32>
    %cst_12 = arith.constant 0.000000e+00 : f32
    %21 = vector.broadcast %cst_12 : f32 to vector<8x1xf32>
    %22 = arith.maximumf %20, %21 : vector<8x1xf32>
    %23 = arith.mulf %18, %22 : vector<8x1xf32>
    %24 = arith.addf %16, %23 : vector<8x1xf32>
    %c0_13 = arith.constant 0 : index
    %c0_14 = arith.constant 0 : index
    %c0_15 = arith.constant 0 : index
    %25 = vector.load %arg6[%c0_13, %c0_14, %c0_15] : memref<1x8x128xf32, #tpu.memory_space<vmem>>, vector<1x8x128xf32>
    %26 = vector.shape_cast %24 : vector<8x1xf32> to vector<1x8x1xf32>
    %cst_16 = arith.constant dense<0.000000e+00> : vector<1xf32>
    %27 = vector.multi_reduction <add>, %26, %cst_16 [1, 2] : vector<1x8x1xf32> to vector<1xf32>
    %28 = vector.shape_cast %27 : vector<1xf32> to vector<1x1x1xf32>
    %29 = vector.extract %28[0, 0, 0] : f32 from vector<1x1x1xf32>
    %30 = vector.broadcast %29 : f32 to vector<1x8x128xf32>
    %31 = arith.addf %25, %30 : vector<1x8x128xf32>
    %c0_17 = arith.constant 0 : index
    %c0_18 = arith.constant 0 : index
    %c0_19 = arith.constant 0 : index
    %32 = vector.load %arg6[%c0_17, %c0_18, %c0_19] : memref<1x8x128xf32, #tpu.memory_space<vmem>>, vector<1x8x128xf32>
    tpu.vector_store %arg6[%c0_17, %c0_18, %c0_19], %31 {strides = array<i32>} : memref<1x8x128xf32, #tpu.memory_space<vmem>>, vector<1x8x128xf32>,
    return
  }
  func.func @transform_0(%arg0: i32, %arg1: i32) -> (i32, i32) {
    %c1_i32 = arith.constant 1 : i32
    %0 = arith.muli %arg0, %c1_i32 : i32
    %1 = arith.addi %0, %arg1 : i32
    %c0_i32 = arith.constant 0 : i32
    %c0_i32_0 = arith.constant 0 : i32
    return %1, %c0_i32 : i32, i32
  }
  func.func @transform_1(%arg0: i32, %arg1: i32) -> (i32, i32) {
    %c1_i32 = arith.constant 1 : i32
    %0 = arith.muli %arg0, %c1_i32 : i32
    %1 = arith.addi %0, %arg1 : i32
    %c0_i32 = arith.constant 0 : i32
    %c0_i32_0 = arith.constant 0 : i32
    return %1, %c0_i32 : i32, i32
  }
  func.func @transform_2(%arg0: i32, %arg1: i32) -> (i32, i32) {
    %c0_i32 = arith.constant 0 : i32
    %c0_i32_0 = arith.constant 0 : i32
    %c0_i32_1 = arith.constant 0 : i32
    return %c0_i32, %c0_i32_0 : i32, i32
  }
  func.func @transform_3(%arg0: i32, %arg1: i32) -> (i32, i32) {
    %c1_i32 = arith.constant 1 : i32
    %0 = arith.muli %arg0, %c1_i32 : i32
    %1 = arith.addi %0, %arg1 : i32
    %c0_i32 = arith.constant 0 : i32
    %c0_i32_0 = arith.constant 0 : i32
    return %1, %c0_i32 : i32, i32
  }
  func.func @transform_4(%arg0: i32, %arg1: i32) -> (i32, i32, i32) {
    %c0_i32 = arith.constant 0 : i32
    %c0_i32_0 = arith.constant 0 : i32
    %c0_i32_1 = arith.constant 0 : i32
    return %arg0, %c0_i32, %c0_i32_0 : i32, i32, i32
  }
}

module attributes {stable_mosaic.version = 11 : i64} {
  func.func @kernel(%arg0: i32, %arg1: i32, %arg2: memref<8x32xf32, #tpu.memory_space<vmem>>, %arg3: memref<8x32xf32, #tpu.memory_space<vmem>>, %arg4: memref<32x32xbf16, #tpu.memory_space<vmem>>, %arg5: memref<8x1xf32, #tpu.memory_space<vmem>>, %arg6: memref<1x8x128xf32, #tpu.memory_space<vmem>>) attributes {dimension_semantics = [#tpu.dimension_semantics<parallel>, #tpu.dimension_semantics<arbitrary>], iteration_bounds = array<i64: 1, 1>, scalar_prefetch = 0 : i64, scratch_operands = 0 : i64, tpu.core_type = #tpu.core_type<tc>, window_params = [{transform_indices = @transform_0, window_bounds = array<i64: 8, 32>}, {transform_indices = @transform_1, window_bounds = array<i64: 8, 32>}, {pipeline_mode = #tpu.pipeline_mode<synchronous>, transform_indices = @transform_2, window_bounds = array<i64: 32, 32>}, {transform_indices = @transform_3, window_bounds = array<i64: 8, 1>}, {transform_indices = @transform_4, window_bounds = array<i64: 1, 8, 128>}]} {
    %c0_i32 = arith.constant 0 : i32
    %0 = arith.cmpi eq, %arg1, %c0_i32 : i32
    %1 = arith.extui %0 : i1 to i32
    %c0_i32_0 = arith.constant 0 : i32
    %2 = arith.cmpi ne, %1, %c0_i32_0 : i32
    scf.if %2 {
      %cst_20 = arith.constant 0.000000e+00 : f32
      %33 = vector.broadcast %cst_20 : f32 to vector<1x8x128xf32>
      %c0_21 = arith.constant 0 : index
      %c0_22 = arith.constant 0 : index
      %c0_23 = arith.constant 0 : index
      %34 = vector.load %arg6[%c0_21, %c0_22, %c0_23] : memref<1x8x128xf32, #tpu.memory_space<vmem>>, vector<1x8x128xf32>
      tpu.vector_store %arg6[%c0_21, %c0_22, %c0_23], %33 {strides = array<i32>} : memref<1x8x128xf32, #tpu.memory_space<vmem>>, vector<1x8x128xf32>,
    } else {
    }
    %c0 = arith.constant 0 : index
    %c0_1 = arith.constant 0 : index
    %3 = vector.load %arg2[%c0, %c0_1] : memref<8x32xf32, #tpu.memory_space<vmem>>, vector<8x32xf32>
    %c0_2 = arith.constant 0 : index
    %c0_3 = arith.constant 0 : index
    %4 = vector.load %arg3[%c0_2, %c0_3] : memref<8x32xf32, #tpu.memory_space<vmem>>, vector<8x32xf32>
    %5 = arith.subf %3, %4 : vector<8x32xf32>
    %6 = arith.truncf %5 : vector<8x32xf32> to vector<8x32xbf16>
    %c0_4 = arith.constant 0 : index
    %c0_5 = arith.constant 0 : index
    %7 = vector.load %arg4[%c0_4, %c0_5] : memref<32x32xbf16, #tpu.memory_space<vmem>>, vector<32x32xbf16>
    %cst = arith.constant dense<0.000000e+00> : vector<8x32xf32>
    %8 = tpu.matmul %6, %7, %cst {dimension_numbers = #tpu.dot_dimension_numbers<[1], [0], [0], [1], [0, 0, 1, 1], [], []>} : vector<8x32xbf16>, vector<32x32xbf16>, vector<8x32xf32> -> vector<8x32xf32>
    %9 = arith.mulf %8, %5 : vector<8x32xf32>
    %cst_6 = arith.constant dense<0.000000e+00> : vector<8xf32>
    %10 = vector.multi_reduction <add>, %9, %cst_6 [1] : vector<8x32xf32> to vector<8xf32>
    %11 = vector.shape_cast %10 : vector<8xf32> to vector<8x1xf32>
    %cst_7 = arith.constant 0.000000e+00 : f32
    %12 = vector.broadcast %cst_7 : f32 to vector<8x1xf32>
    %13 = arith.maximumf %11, %12 : vector<8x1xf32>
    %14 = math.sqrt %13 : vector<8x1xf32>
    %c0_8 = arith.constant 0 : index
    %c0_9 = arith.constant 0 : index
    %15 = vector.load %arg5[%c0_8, %c0_9] : memref<8x1xf32, #tpu.memory_space<vmem>>, vector<8x1xf32>
    %16 = arith.mulf %15, %14 : vector<8x1xf32>
    %cst_10 = arith.constant 1.000000e+00 : f32
    %17 = vector.broadcast %cst_10 : f32 to vector<8x1xf32>
    %18 = arith.subf %17, %15 : vector<8x1xf32>
    %cst_11 = arith.constant 1.000000e+00 : f32
    %19 = vector.broadcast %cst_11 : f32 to vector<8x1xf32>
    %20 = arith.subf %19, %14 : vector<8x1xf32>
    %cst_12 = arith.constant 0.000000e+00 : f32
    %21 = vector.broadcast %cst_12 : f32 to vector<8x1xf32>
    %22 = arith.maximumf %20, %21 : vector<8x1xf32>
    %23 = arith.mulf %18, %22 : vector<8x1xf32>
    %24 = arith.addf %16, %23 : vector<8x1xf32>
    %c0_13 = arith.constant 0 : index
    %c0_14 = arith.constant 0 : index
    %c0_15 = arith.constant 0 : index
    %25 = vector.load %arg6[%c0_13, %c0_14, %c0_15] : memref<1x8x128xf32, #tpu.memory_space<vmem>>, vector<1x8x128xf32>
    %26 = vector.shape_cast %24 : vector<8x1xf32> to vector<1x8x1xf32>
    %cst_16 = arith.constant dense<0.000000e+00> : vector<1xf32>
    %27 = vector.multi_reduction <add>, %26, %cst_16 [1, 2] : vector<1x8x1xf32> to vector<1xf32>
    %28 = vector.shape_cast %27 : vector<1xf32> to vector<1x1x1xf32>
    %29 = vector.extract %28[0, 0, 0] : f32 from vector<1x1x1xf32>
    %30 = vector.broadcast %29 : f32 to vector<1x8x128xf32>
    %31 = arith.addf %25, %30 : vector<1x8x128xf32>
    %c0_17 = arith.constant 0 : index
    %c0_18 = arith.constant 0 : index
    %c0_19 = arith.constant 0 : index
    %32 = vector.load %arg6[%c0_17, %c0_18, %c0_19] : memref<1x8x128xf32, #tpu.memory_space<vmem>>, vector<1x8x128xf32>
    tpu.vector_store %arg6[%c0_17, %c0_18, %c0_19], %31 {strides = array<i32>} : memref<1x8x128xf32, #tpu.memory_space<vmem>>, vector<1x8x128xf32>,
    return
  }
  func.func @transform_0(%arg0: i32, %arg1: i32) -> (i32, i32) {
    %c1_i32 = arith.constant 1 : i32
    %0 = arith.muli %arg0, %c1_i32 : i32
    %1 = arith.addi %0, %arg1 : i32
    %c0_i32 = arith.constant 0 : i32
    %c0_i32_0 = arith.constant 0 : i32
    return %1, %c0_i32 : i32, i32
  }
  func.func @transform_1(%arg0: i32, %arg1: i32) -> (i32, i32) {
    %c1_i32 = arith.constant 1 : i32
    %0 = arith.muli %arg0, %c1_i32 : i32
    %1 = arith.addi %0, %arg1 : i32
    %c0_i32 = arith.constant 0 : i32
    %c0_i32_0 = arith.constant 0 : i32
    return %1, %c0_i32 : i32, i32
  }
  func.func @transform_2(%arg0: i32, %arg1: i32) -> (i32, i32) {
    %c0_i32 = arith.constant 0 : i32
    %c0_i32_0 = arith.constant 0 : i32
    %c0_i32_1 = arith.constant 0 : i32
    return %c0_i32, %c0_i32_0 : i32, i32
  }
  func.func @transform_3(%arg0: i32, %arg1: i32) -> (i32, i32) {
    %c1_i32 = arith.constant 1 : i32
    %0 = arith.muli %arg0, %c1_i32 : i32
    %1 = arith.addi %0, %arg1 : i32
    %c0_i32 = arith.constant 0 : i32
    %c0_i32_0 = arith.constant 0 : i32
    return %1, %c0_i32 : i32, i32
  }
  func.func @transform_4(%arg0: i32, %arg1: i32) -> (i32, i32, i32) {
    %c0_i32 = arith.constant 0 : i32
    %c0_i32_0 = arith.constant 0 : i32
    %c0_i32_1 = arith.constant 0 : i32
    return %arg0, %c0_i32, %c0_i32_0 : i32, i32, i32
  }
}

</mosaic_0001>

<llo_original>
// kernel: tpu_custom_call.1
$region0: #{tpu_custom_call.1}
  #allocation0 [shape = 'u32[]', space=smem, size = 0x4, offset = 0x4, fixed_abs, tag = 'smem constant byte address 0x4 - core index']
  #allocation1 [shape = 'u32[144,128]{1,0:T(1,128)}', space=vmem, size = 0x12000, scoped, tag = 'internal scratch']
  %s0 = inlined_call_operand.hbm [shape: f32[8,32], index: 0, kind: input, shape index: {}]
  %s1 = inlined_call_operand.hbm [shape: f32[8,32], index: 1, kind: input, shape index: {}]
  %s2 = inlined_call_operand.hbm [shape: bf16[32,32], index: 2, kind: input, shape index: {}]
  %s3 = inlined_call_operand.hbm [shape: f32[8,1], index: 3, kind: input, shape index: {}]
  %s4 = inlined_call_operand.hbm [shape: f32[1,8,128], index: 4, kind: output, shape index: {}]
  %s5 = sld [smem:[#allocation0]]
  $region46: #{tpu_custom_call.1} parent=0
    _
  %s7 = ssub.s32 1, %s5
  %s8 = scalar_select 0, %s7, %s5
  $region1: #{tpu_custom_call.1} parent=0
    #allocation2 [shape = 'u8[4096]{0}', space=vmem, size = 0x1000, scoped, tag = 'input window, operand 0, single buffered']
    #allocation3 [shape = 's32[1]{0}', space=sflag, size = 0x4, scoped, tag = 'scoped memory for tpu_custom_call.1']
    #allocation4 [shape = 's32[1]{0}', space=sflag, size = 0x4, scoped, tag = 'scoped memory for tpu_custom_call.1']
    #allocation5 [shape = 'u8[4096]{0}', space=vmem, size = 0x1000, scoped, tag = 'input window, operand 1, single buffered']
    #allocation6 [shape = 's32[1]{0}', space=sflag, size = 0x4, scoped, tag = 'scoped memory for tpu_custom_call.1']
    #allocation7 [shape = 'u8[8192]{0}', space=vmem, size = 0x2000, scoped, tag = 'input window, operand 2, single buffered']
    #allocation8 [shape = 'u8[4096]{0}', space=vmem, size = 0x1000, scoped, tag = 'input window, operand 3, single buffered']
    #allocation9 [shape = 's32[1]{0}', space=sflag, size = 0x4, scoped, tag = 'scoped memory for tpu_custom_call.1']
    #allocation10 [shape = 'u8[4096]{0}', space=vmem, size = 0x1000, scoped, tag = 'output window, operand 0, single buffered']
    %9 = vsyncpa [#allocation3], 0
    %10 = vsyncpa [#allocation6], 0
    %11 = vsyncpa [#allocation9], 0
    %12 = vsyncpa [#allocation4], 0
    // Predicated region
    $region2: #{tpu_custom_call.1} parent=1 // pred_check
      _
    $region3: #{tpu_custom_call.1} parent=1 // pred_check_branch
      %14 = sbr.rel (0) target = $region5
    $region4: #{tpu_custom_call.1} parent=1 // pred_region
      %s15 = sadd.s32 0, 0
      %s17 = ssub.s32 128, 128
      %18 = vsyncadd [#allocation3], %s17
      %s19 = smul.addr %s15, 128
      %s20 = scalar_lea.hbm %s0, %s19
      %s22 = sshll.u32 [#allocation2], 4
      %s23 = int_to_ptr.vmem [resolvable:$true] %s22
      %25 = dma.hbm_to_vmem [thread:$0]  %s20, 128, %s23, [#allocation3]
    $region5: #{tpu_custom_call.1} parent=1 // pred_fallthru
      _
    // Predicated region
    $region6: #{tpu_custom_call.1} parent=1 // pred_check
      _
    $region7: #{tpu_custom_call.1} parent=1 // pred_check_branch
      %27 = sbr.rel (0) target = $region9
    $region8: #{tpu_custom_call.1} parent=1 // pred_region
      %s28 = sadd.s32 0, 0
      %s30 = ssub.s32 128, 128
      %31 = vsyncadd [#allocation6], %s30
      %s32 = smul.addr %s28, 128
      %s33 = scalar_lea.hbm %s1, %s32
      %s35 = sshll.u32 [#allocation5], 4
      %s36 = int_to_ptr.vmem [resolvable:$true] %s35
      %38 = dma.hbm_to_vmem [thread:$0]  %s33, 128, %s36, [#allocation6]
    $region9: #{tpu_custom_call.1} parent=1 // pred_fallthru
      _
    // Predicated region
    $region10: #{tpu_custom_call.1} parent=1 // pred_check
      _
    $region11: #{tpu_custom_call.1} parent=1 // pred_check_branch
      %40 = sbr.rel (0) target = $region13
    $region12: #{tpu_custom_call.1} parent=1 // pred_region
      %s42 = ssub.s32 256, 256
      %43 = vsyncadd [#allocation6], %s42
      %s44 = sshll.u32 [#allocation7], 4
      %s45 = int_to_ptr.vmem [resolvable:$true] %s44
      %50 = dma.hbm_to_vmem [thread:$0]  %s2, 256, %s45, [#allocation6], 64, 64, 4
    $region13: #{tpu_custom_call.1} parent=1 // pred_fallthru
      _
    // Predicated region
    $region14: #{tpu_custom_call.1} parent=1 // pred_check
      _
    $region15: #{tpu_custom_call.1} parent=1 // pred_check_branch
      %52 = sbr.rel (0) target = $region17
    $region16: #{tpu_custom_call.1} parent=1 // pred_region
      %s53 = sadd.s32 0, 0
      %s55 = ssub.s32 128, 128
      %56 = vsyncadd [#allocation9], %s55
      %s57 = smul.addr %s53, 128
      %s58 = scalar_lea.hbm %s3, %s57
      %s60 = sshll.u32 [#allocation8], 4
      %s61 = int_to_ptr.vmem [resolvable:$true] %s60
      %63 = dma.hbm_to_vmem [thread:$0]  %s58, 128, %s61, [#allocation9]
    $region17: #{tpu_custom_call.1} parent=1 // pred_fallthru
      _
    // Predicated region
    $region18: #{tpu_custom_call.1} parent=1 // pred_check
      _
    $region19: #{tpu_custom_call.1} parent=1 // pred_check_branch
      %65 = sbr.rel (0) target = $region21
    $region20: #{tpu_custom_call.1} parent=1 // pred_region
      %66 = dma.done [#allocation3], 128
    $region21: #{tpu_custom_call.1} parent=1 // pred_fallthru
      _
    // Predicated region
    $region22: #{tpu_custom_call.1} parent=1 // pred_check
      _
    $region23: #{tpu_custom_call.1} parent=1 // pred_check_branch
      %68 = sbr.rel (0) target = $region25
    $region24: #{tpu_custom_call.1} parent=1 // pred_region
      %69 = dma.done [#allocation6], 128
    $region25: #{tpu_custom_call.1} parent=1 // pred_fallthru
      _
    // Predicated region
    $region26: #{tpu_custom_call.1} parent=1 // pred_check
      _
    $region27: #{tpu_custom_call.1} parent=1 // pred_check_branch
      %71 = sbr.rel (0) target = $region29
    $region28: #{tpu_custom_call.1} parent=1 // pred_region
      %72 = dma.done [#allocation6], 256
    $region29: #{tpu_custom_call.1} parent=1 // pred_fallthru
      _
    // Predicated region
    $region30: #{tpu_custom_call.1} parent=1 // pred_check
      _
    $region31: #{tpu_custom_call.1} parent=1 // pred_check_branch
      %74 = sbr.rel (0) target = $region33
    $region32: #{tpu_custom_call.1} parent=1 // pred_region
      %75 = dma.done [#allocation9], 128
    $region33: #{tpu_custom_call.1} parent=1 // pred_fallthru
      _
    %s76 = sadd.s32 0, 0
    %s77 = sadd.s32 0, 0
    %s78 = sadd.s32 0, 0
    %p80 = scmp.eq.s32.totalorder 0, 0
    // Predicated region
    $region34: #{tpu_custom_call.1} parent=1 // pred_check
      %p81 = pneg %p80
    $region35: #{tpu_custom_call.1} parent=1 // pred_check_branch
      %83 = sbr.rel (%p81) target = $region37
    $region36: #{tpu_custom_call.1} parent=1 // pred_region
      %84 = vst [vmem:[#allocation10] sm:$0xff] 0.0
    $region37: #{tpu_custom_call.1} parent=1 // pred_fallthru
      _
    %v85 = vld [vmem:[#allocation2] sm:$0xff]
    %v86 = vld [vmem:[#allocation5] sm:$0xff]
    %v87 = vsub.f32 %v85, %v86
    %v88 = vpack.c.bf16 %v87, %v87
    %v89 = vld [vmem:[#allocation7] sm:$0xf]
    %v90 = vld [vmem:[#allocation7 + $0x4] sm:$0xf]
    %v91 = vld [vmem:[#allocation7 + $0x8] sm:$0xf]
    %v92 = vld [vmem:[#allocation7 + $0xc] sm:$0xf]
    %v97 = vunpack.c.l.b16 %v89
    %v98 = vunpack.c.l.b16 %v90
    %v99 = vunpack.c.l.b16 %v91
    %v100 = vunpack.c.l.b16 %v92
    %v101 = vpack.c.b16 %v98, %v97
    %v102 = vpack.c.b16 %v100, %v99
    %vm105 = vcmask 261120
    %v107 = vsel %vm105, %v88, 0
    %109 = vmatprep.subr.bf16.mxu0 0
    %110 = vmatpush1.bf16.msra.mxu0 %v101
    %111 = vmatprep.subr.bf16.mxu0 0
    %112 = vmatpush1.bf16.msra.mxu0 %v102
    %113 = vmatprep.subr.bf16.mxu0 0
    %114 = vmatpush1.bf16.msra.mxu0 0
    %115 = vmatprep.subr.bf16.mxu0 0
    %116 = vmatpush1.bf16.msra.mxu0 0
    %117 = vmatprep.subr.bf16.mxu0 0
    %118 = vmatpush1.bf16.msra.mxu0 0
    %119 = vmatprep.subr.bf16.mxu0 0
    %120 = vmatpush1.bf16.msra.mxu0 0
    %121 = vmatprep.subr.bf16.mxu0 0
    %122 = vmatpush1.bf16.msra.mxu0 0
    %123 = vmatprep.subr.bf16.mxu0 0
    %124 = vmatpush1.bf16.msra.mxu0 0
    %125 = vmatprep.subr.bf16.mxu0 0
    %126 = vmatpush1.bf16.msra.mxu0 0
    %127 = vmatprep.subr.bf16.mxu0 0
    %128 = vmatpush1.bf16.msra.mxu0 0
    %129 = vmatprep.subr.bf16.mxu0 0
    %130 = vmatpush1.bf16.msra.mxu0 0
    %131 = vmatprep.subr.bf16.mxu0 0
    %132 = vmatpush1.bf16.msra.mxu0 0
    %133 = vmatprep.subr.bf16.mxu0 0
    %134 = vmatpush1.bf16.msra.mxu0 0
    %135 = vmatprep.subr.bf16.mxu0 0
    %136 = vmatpush1.bf16.msra.mxu0 0
    %137 = vmatprep.subr.bf16.mxu0 0
    %138 = vmatpush1.bf16.msra.mxu0 0
    %139 = vmatprep.subr.bf16.mxu0 0
    %140 = vmatpush1.bf16.msra.mxu0 0
    %141 = vmatprep.mubr.bf16.mxu0 0
    %142 = vmatmul.mubr.bf16.gmra.mrb[0].mxu0 %v107
    %v143 = vpop.f32.mrb[0].mxu0
    %v144 = vadd.f32 0.0, %v143
    %v145 = vpop.f32.mrb[0].mxu0
    %v146 = vpop.f32.mrb[0].mxu0
    %v147 = vpop.f32.mrb[0].mxu0
    %148 = vdwg.mxu0
    %v149 = vmul.f32 %v144, %v87
    %v150 = vsel %vm105, %v149, 0.0
    %151 = vadd.xlane.f32.xlu0 %v150
    %v152 = vpop.xlane.xlu0 %151
    %v153 = vmax.f32 %v152, 0.0
    %v154 = vrsqrt.pop %v153
    %v155 = vmul.f32 %v153, %v154
    %vm156 = vcmp.eq.f32.partialorder %v153, inf
    %v157 = vsel %vm156, %v153, %v155
    %vm158 = vcmp.eq.f32.partialorder %v153, 0.0
    %v159 = vand.u32 %v153, 2147483648
    %v160 = vsel %vm158, %v159, %v157
    %v161 = vld [vmem:[#allocation8] sm:$0xff]
    %v162 = vmul.f32 %v161, %v160
    %v163 = vsub.f32 1.0, %v161
    %v164 = vsub.f32 1.0, %v160
    %v165 = vmax.f32 %v164, 0.0
    %v166 = vmul.f32 %v163, %v165
    %v167 = vadd.f32 %v162, %v166
    %v168 = vld [vmem:[#allocation10] sm:$0xff]
    %vm169 = vcmask 7168
    %v170 = vsel %vm169, %v167, 0.0
    %171 = vadd.xlane.f32.xlu0 %v170
    %v172 = vpop.xlane.xlu0 %171
    %v173 = vrot.slane %v172, 4
    %v174 = vadd.f32 %v172, %v173
    %v175 = vrot.slane %v174, 2
    %v176 = vadd.f32 %v174, %v175
    %v177 = vrot.slane %v176, 1
    %v178 = vadd.f32 %v176, %v177
    %s179 = vtos %v178
    %v180 = vstv %s179
    %v181 = vadd.f32 %v168, %v180
    %182 = vst [vmem:[#allocation10] sm:$0xff] %v181
    // Predicated region
    $region38: #{tpu_custom_call.1} parent=1 // pred_check
      _
    $region39: #{tpu_custom_call.1} parent=1 // pred_check_branch
      %184 = sbr.rel (0) target = $region41
    $region40: #{tpu_custom_call.1} parent=1 // pred_region
      %s186 = ssub.s32 128, 128
      %187 = vsyncadd [#allocation4], %s186
      %s189 = sshll.u32 [#allocation10], 4
      %s190 = int_to_ptr.vmem [resolvable:$true] %s189
      %192 = dma.vmem_to_hbm [thread:$0]  %s190, 128, %s4, [#allocation4]
    $region41: #{tpu_custom_call.1} parent=1 // pred_fallthru
      _
    // Predicated region
    $region42: #{tpu_custom_call.1} parent=1 // pred_check
      _
    $region43: #{tpu_custom_call.1} parent=1 // pred_check_branch
      %194 = sbr.rel (0) target = $region45
    $region44: #{tpu_custom_call.1} parent=1 // pred_region
      %195 = dma.done [#allocation4], 128
    $region45: #{tpu_custom_call.1} parent=1 // pred_fallthru
      _
    %196 = vsyncpa [#allocation3], 1
    %197 = vsyncpa [#allocation6], 1
    %198 = vsyncpa [#allocation9], 1
    %199 = vsyncpa [#allocation4], 1

// kernel: tpu_custom_call.1
$region0: #{tpu_custom_call.1}
  #allocation0 [shape = 'u32[]', space=smem, size = 0x4, offset = 0x4, fixed_abs, tag = 'smem constant byte address 0x4 - core index']
  #allocation1 [shape = 'u32[144,128]{1,0:T(1,128)}', space=vmem, size = 0x12000, scoped, tag = 'internal scratch']
  %s0 = inlined_call_operand.hbm [shape: f32[8,32], index: 0, kind: input, shape index: {}]
  %s1 = inlined_call_operand.hbm [shape: f32[8,32], index: 1, kind: input, shape index: {}]
  %s2 = inlined_call_operand.hbm [shape: bf16[32,32], index: 2, kind: input, shape index: {}]
  %s3 = inlined_call_operand.hbm [shape: f32[8,1], index: 3, kind: input, shape index: {}]
  %s4 = inlined_call_operand.hbm [shape: f32[1,8,128], index: 4, kind: output, shape index: {}]
  %s5 = sld [smem:[#allocation0]]
  $region46: #{tpu_custom_call.1} parent=0
    _
  %s7 = ssub.s32 1, %s5
  %s8 = scalar_select 0, %s7, %s5
  $region1: #{tpu_custom_call.1} parent=0
    #allocation2 [shape = 'u8[4096]{0}', space=vmem, size = 0x1000, scoped, tag = 'input window, operand 0, single buffered']
    #allocation3 [shape = 's32[1]{0}', space=sflag, size = 0x4, scoped, tag = 'scoped memory for tpu_custom_call.1']
    #allocation4 [shape = 's32[1]{0}', space=sflag, size = 0x4, scoped, tag = 'scoped memory for tpu_custom_call.1']
    #allocation5 [shape = 'u8[4096]{0}', space=vmem, size = 0x1000, scoped, tag = 'input window, operand 1, single buffered']
    #allocation6 [shape = 's32[1]{0}', space=sflag, size = 0x4, scoped, tag = 'scoped memory for tpu_custom_call.1']
    #allocation7 [shape = 'u8[8192]{0}', space=vmem, size = 0x2000, scoped, tag = 'input window, operand 2, single buffered']
    #allocation8 [shape = 'u8[4096]{0}', space=vmem, size = 0x1000, scoped, tag = 'input window, operand 3, single buffered']
    #allocation9 [shape = 's32[1]{0}', space=sflag, size = 0x4, scoped, tag = 'scoped memory for tpu_custom_call.1']
    #allocation10 [shape = 'u8[4096]{0}', space=vmem, size = 0x1000, scoped, tag = 'output window, operand 0, single buffered']
    %9 = vsyncpa [#allocation3], 0
    %10 = vsyncpa [#allocation6], 0
    %11 = vsyncpa [#allocation9], 0
    %12 = vsyncpa [#allocation4], 0
    // Predicated region
    $region2: #{tpu_custom_call.1} parent=1 // pred_check
      _
    $region3: #{tpu_custom_call.1} parent=1 // pred_check_branch
      %14 = sbr.rel (0) target = $region5
    $region4: #{tpu_custom_call.1} parent=1 // pred_region
      %s15 = sadd.s32 0, 0
      %s17 = ssub.s32 128, 128
      %18 = vsyncadd [#allocation3], %s17
      %s19 = smul.addr %s15, 128
      %s20 = scalar_lea.hbm %s0, %s19
      %s22 = sshll.u32 [#allocation2], 4
      %s23 = int_to_ptr.vmem [resolvable:$true] %s22
      %25 = dma.hbm_to_vmem [thread:$0]  %s20, 128, %s23, [#allocation3]
    $region5: #{tpu_custom_call.1} parent=1 // pred_fallthru
      _
    // Predicated region
    $region6: #{tpu_custom_call.1} parent=1 // pred_check
      _
    $region7: #{tpu_custom_call.1} parent=1 // pred_check_branch
      %27 = sbr.rel (0) target = $region9
    $region8: #{tpu_custom_call.1} parent=1 // pred_region
      %s28 = sadd.s32 0, 0
      %s30 = ssub.s32 128, 128
      %31 = vsyncadd [#allocation6], %s30
      %s32 = smul.addr %s28, 128
      %s33 = scalar_lea.hbm %s1, %s32
      %s35 = sshll.u32 [#allocation5], 4
      %s36 = int_to_ptr.vmem [resolvable:$true] %s35
      %38 = dma.hbm_to_vmem [thread:$0]  %s33, 128, %s36, [#allocation6]
    $region9: #{tpu_custom_call.1} parent=1 // pred_fallthru
      _
    // Predicated region
    $region10: #{tpu_custom_call.1} parent=1 // pred_check
      _
    $region11: #{tpu_custom_call.1} parent=1 // pred_check_branch
      %40 = sbr.rel (0) target = $region13
    $region12: #{tpu_custom_call.1} parent=1 // pred_region
      %s42 = ssub.s32 256, 256
      %43 = vsyncadd [#allocation6], %s42
      %s44 = sshll.u32 [#allocation7], 4
      %s45 = int_to_ptr.vmem [resolvable:$true] %s44
      %50 = dma.hbm_to_vmem [thread:$0]  %s2, 256, %s45, [#allocation6], 64, 64, 4
    $region13: #{tpu_custom_call.1} parent=1 // pred_fallthru
      _
    // Predicated region
    $region14: #{tpu_custom_call.1} parent=1 // pred_check
      _
    $region15: #{tpu_custom_call.1} parent=1 // pred_check_branch
      %52 = sbr.rel (0) target = $region17
    $region16: #{tpu_custom_call.1} parent=1 // pred_region
      %s53 = sadd.s32 0, 0
      %s55 = ssub.s32 128, 128
      %56 = vsyncadd [#allocation9], %s55
      %s57 = smul.addr %s53, 128
      %s58 = scalar_lea.hbm %s3, %s57
      %s60 = sshll.u32 [#allocation8], 4
      %s61 = int_to_ptr.vmem [resolvable:$true] %s60
      %63 = dma.hbm_to_vmem [thread:$0]  %s58, 128, %s61, [#allocation9]
    $region17: #{tpu_custom_call.1} parent=1 // pred_fallthru
      _
    // Predicated region
    $region18: #{tpu_custom_call.1} parent=1 // pred_check
      _
    $region19: #{tpu_custom_call.1} parent=1 // pred_check_branch
      %65 = sbr.rel (0) target = $region21
    $region20: #{tpu_custom_call.1} parent=1 // pred_region
      %66 = dma.done [#allocation3], 128
    $region21: #{tpu_custom_call.1} parent=1 // pred_fallthru
      _
    // Predicated region
    $region22: #{tpu_custom_call.1} parent=1 // pred_check
      _
    $region23: #{tpu_custom_call.1} parent=1 // pred_check_branch
      %68 = sbr.rel (0) target = $region25
    $region24: #{tpu_custom_call.1} parent=1 // pred_region
      %69 = dma.done [#allocation6], 128
    $region25: #{tpu_custom_call.1} parent=1 // pred_fallthru
      _
    // Predicated region
    $region26: #{tpu_custom_call.1} parent=1 // pred_check
      _
    $region27: #{tpu_custom_call.1} parent=1 // pred_check_branch
      %71 = sbr.rel (0) target = $region29
    $region28: #{tpu_custom_call.1} parent=1 // pred_region
      %72 = dma.done [#allocation6], 256
    $region29: #{tpu_custom_call.1} parent=1 // pred_fallthru
      _
    // Predicated region
    $region30: #{tpu_custom_call.1} parent=1 // pred_check
      _
    $region31: #{tpu_custom_call.1} parent=1 // pred_check_branch
      %74 = sbr.rel (0) target = $region33
    $region32: #{tpu_custom_call.1} parent=1 // pred_region
      %75 = dma.done [#allocation9], 128
    $region33: #{tpu_custom_call.1} parent=1 // pred_fallthru
      _
    %s76 = sadd.s32 0, 0
    %s77 = sadd.s32 0, 0
    %s78 = sadd.s32 0, 0
    %p80 = scmp.eq.s32.totalorder 0, 0
    // Predicated region
    $region34: #{tpu_custom_call.1} parent=1 // pred_check
      %p81 = pneg %p80
    $region35: #{tpu_custom_call.1} parent=1 // pred_check_branch
      %83 = sbr.rel (%p81) target = $region37
    $region36: #{tpu_custom_call.1} parent=1 // pred_region
      %84 = vst [vmem:[#allocation10] sm:$0xff] 0.0
    $region37: #{tpu_custom_call.1} parent=1 // pred_fallthru
      _
    %v85 = vld [vmem:[#allocation2] sm:$0xff]
    %v86 = vld [vmem:[#allocation5] sm:$0xff]
    %v87 = vsub.f32 %v85, %v86
    %v88 = vpack.c.bf16 %v87, %v87
    %v89 = vld [vmem:[#allocation7] sm:$0xf]
    %v90 = vld [vmem:[#allocation7 + $0x4] sm:$0xf]
    %v91 = vld [vmem:[#allocation7 + $0x8] sm:$0xf]
    %v92 = vld [vmem:[#allocation7 + $0xc] sm:$0xf]
    %v97 = vunpack.c.l.b16 %v89
    %v98 = vunpack.c.l.b16 %v90
    %v99 = vunpack.c.l.b16 %v91
    %v100 = vunpack.c.l.b16 %v92
    %v101 = vpack.c.b16 %v98, %v97
    %v102 = vpack.c.b16 %v100, %v99
    %vm105 = vcmask 261120
    %v107 = vsel %vm105, %v88, 0
    %109 = vmatprep.subr.bf16.mxu0 0
    %110 = vmatpush1.bf16.msra.mxu0 %v101
    %111 = vmatprep.subr.bf16.mxu0 0
    %112 = vmatpush1.bf16.msra.mxu0 %v102
    %113 = vmatprep.subr.bf16.mxu0 0
    %114 = vmatpush1.bf16.msra.mxu0 0
    %115 = vmatprep.subr.bf16.mxu0 0
    %116 = vmatpush1.bf16.msra.mxu0 0
    %117 = vmatprep.subr.bf16.mxu0 0
    %118 = vmatpush1.bf16.msra.mxu0 0
    %119 = vmatprep.subr.bf16.mxu0 0
    %120 = vmatpush1.bf16.msra.mxu0 0
    %121 = vmatprep.subr.bf16.mxu0 0
    %122 = vmatpush1.bf16.msra.mxu0 0
    %123 = vmatprep.subr.bf16.mxu0 0
    %124 = vmatpush1.bf16.msra.mxu0 0
    %125 = vmatprep.subr.bf16.mxu0 0
    %126 = vmatpush1.bf16.msra.mxu0 0
    %127 = vmatprep.subr.bf16.mxu0 0
    %128 = vmatpush1.bf16.msra.mxu0 0
    %129 = vmatprep.subr.bf16.mxu0 0
    %130 = vmatpush1.bf16.msra.mxu0 0
    %131 = vmatprep.subr.bf16.mxu0 0
    %132 = vmatpush1.bf16.msra.mxu0 0
    %133 = vmatprep.subr.bf16.mxu0 0
    %134 = vmatpush1.bf16.msra.mxu0 0
    %135 = vmatprep.subr.bf16.mxu0 0
    %136 = vmatpush1.bf16.msra.mxu0 0
    %137 = vmatprep.subr.bf16.mxu0 0
    %138 = vmatpush1.bf16.msra.mxu0 0
    %139 = vmatprep.subr.bf16.mxu0 0
    %140 = vmatpush1.bf16.msra.mxu0 0
    %141 = vmatprep.mubr.bf16.mxu0 0
    %142 = vmatmul.mubr.bf16.gmra.mrb[0].mxu0 %v107
    %v143 = vpop.f32.mrb[0].mxu0
    %v144 = vadd.f32 0.0, %v143
    %v145 = vpop.f32.mrb[0].mxu0
    %v146 = vpop.f32.mrb[0].mxu0
    %v147 = vpop.f32.mrb[0].mxu0
    %148 = vdwg.mxu0
    %v149 = vmul.f32 %v144, %v87
    %v150 = vsel %vm105, %v149, 0.0
    %151 = vadd.xlane.f32.xlu0 %v150
    %v152 = vpop.xlane.xlu0 %151
    %v153 = vmax.f32 %v152, 0.0
    %v154 = vrsqrt.pop %v153
    %v155 = vmul.f32 %v153, %v154
    %vm156 = vcmp.eq.f32.partialorder %v153, inf
    %v157 = vsel %vm156, %v153, %v155
    %vm158 = vcmp.eq.f32.partialorder %v153, 0.0
    %v159 = vand.u32 %v153, 2147483648
    %v160 = vsel %vm158, %v159, %v157
    %v161 = vld [vmem:[#allocation8] sm:$0xff]
    %v162 = vmul.f32 %v161, %v160
    %v163 = vsub.f32 1.0, %v161
    %v164 = vsub.f32 1.0, %v160
    %v165 = vmax.f32 %v164, 0.0
    %v166 = vmul.f32 %v163, %v165
    %v167 = vadd.f32 %v162, %v166
    %v168 = vld [vmem:[#allocation10] sm:$0xff]
    %vm169 = vcmask 7168
    %v170 = vsel %vm169, %v167, 0.0
    %171 = vadd.xlane.f32.xlu0 %v170
    %v172 = vpop.xlane.xlu0 %171
    %v173 = vrot.slane %v172, 4
    %v174 = vadd.f32 %v172, %v173
    %v175 = vrot.slane %v174, 2
    %v176 = vadd.f32 %v174, %v175
    %v177 = vrot.slane %v176, 1
    %v178 = vadd.f32 %v176, %v177
    %s179 = vtos %v178
    %v180 = vstv %s179
    %v181 = vadd.f32 %v168, %v180
    %182 = vst [vmem:[#allocation10] sm:$0xff] %v181
    // Predicated region
    $region38: #{tpu_custom_call.1} parent=1 // pred_check
      _
    $region39: #{tpu_custom_call.1} parent=1 // pred_check_branch
      %184 = sbr.rel (0) target = $region41
    $region40: #{tpu_custom_call.1} parent=1 // pred_region
      %s186 = ssub.s32 128, 128
      %187 = vsyncadd [#allocation4], %s186
      %s189 = sshll.u32 [#allocation10], 4
      %s190 = int_to_ptr.vmem [resolvable:$true] %s189
      %192 = dma.vmem_to_hbm [thread:$0]  %s190, 128, %s4, [#allocation4]
    $region41: #{tpu_custom_call.1} parent=1 // pred_fallthru
      _
    // Predicated region
    $region42: #{tpu_custom_call.1} parent=1 // pred_check
      _
    $region43: #{tpu_custom_call.1} parent=1 // pred_check_branch
      %194 = sbr.rel (0) target = $region45
    $region44: #{tpu_custom_call.1} parent=1 // pred_region
      %195 = dma.done [#allocation4], 128
    $region45: #{tpu_custom_call.1} parent=1 // pred_fallthru
      _
    %196 = vsyncpa [#allocation3], 1
    %197 = vsyncpa [#allocation6], 1
    %198 = vsyncpa [#allocation9], 1
    %199 = vsyncpa [#allocation4], 1

</llo_original>
